<compile_context>
chip_gen: v7x
topology: tpu7x:2x2x1
jax: 0.10.0
libtpu: 0.0.40
codegen_flags: <defaults>
</compile_context>

<pallas_src>
import functools

import jax
import jax.numpy as jnp
from jax.experimental import pallas as pl
from jax.experimental.pallas import tpu as pltpu

NEG_SLOPE = 0.01  # PyTorch F.leaky_relu default negative_slope
LANE = 128        # vreg lane width
SUBLANE = 8       # f32 sublane group


def _round_up(x, m):
    return ((x + m - 1) // m) * m


def _make_fused_mlp_kernel(n_layers, compute_dtype):
    """Fused kernel for `n_layers` Linear(+leaky_relu) layers.

    Kernel args: (x_ref, w0_ref, ..., w{n-1}_ref, o_ref)
      x_ref : (tm, Kp0)        padded activation tile
      wi_ref: (Kp_i, Np_i)     pre-transposed, zero-padded weight (K on
                               sublane, N on lane -> natural MXU layout,
                               lane-dense output)
      o_ref : (tm, Np_last)    padded output tile
    """

    def kernel(x_ref, *rest):
        w_refs = rest[:n_layers]
        o_ref = rest[n_layers]

        h = x_ref[...]
        for w_ref in w_refs:
            # MXU matmul: contract last dim of h with first dim of w.
            y = jax.lax.dot_general(
                h.astype(compute_dtype),
                w_ref[...].astype(compute_dtype),
                dimension_numbers=(((1,), (0,)), ((), ())),
                preferred_element_type=jnp.float32,
            )
            # leaky_relu(negative_slope=0.01): since 0.01 < 1,
            # max(y, 0.01*y) == leaky_relu(y) exactly -> 2 VPU ops, kept in
            # f32 (v5e has no bf16 VPU path).
            h = jnp.maximum(y, NEG_SLOPE * y)
        o_ref[...] = h.astype(o_ref.dtype)

    return kernel


@functools.partial(jax.jit, static_argnames=("compute_dtype", "block_m"))
def mlp_forward(x, weights, *, compute_dtype=jnp.float32, block_m=512):
    """Fused MLP forward.

    x       : (M, dims[0]) activations
    weights : list of PyTorch-style Linear weights, weights[i] has shape
              (dims[i+1], dims[i])  (out_features, in_features), bias=False.
    Returns : (M, dims[-1]) with leaky_relu applied after EVERY layer.
    """
    M, K0 = x.shape
    n_layers = len(weights)
    dims = [K0] + [int(w.shape[0]) for w in weights]
    for i, w in enumerate(weights):
        assert w.shape == (dims[i + 1], dims[i]), (i, w.shape, dims)

    # Pad every feature dim to the 128-lane width (exact: zero pad).
    pdims = [_round_up(d, LANE) for d in dims]

    # M tile: multiple of the f32 sublane group; grid over M so v7x can shard
    # rows across its two TensorCores when the batch is large.
    mp8 = _round_up(M, SUBLANE)
    tm = min(block_m, mp8)
    mp = _round_up(mp8, tm)
    grid_m = mp // tm

    # Pad activations (rows and feature columns) with zeros.
    xp = jnp.zeros((mp, pdims[0]), x.dtype).at[:M, :K0].set(x)

    # Pre-transpose weights to (K, N) and zero-pad both K and N to 128s.
    # One-time, wrapper-side transform (fused under jit).
    wps = []
    for i, w in enumerate(weights):
        wt = w.T  # (K_i, N_i)
        wp = (
            jnp.zeros((pdims[i], pdims[i + 1]), w.dtype)
            .at[: dims[i], : dims[i + 1]]
            .set(wt)
        )
        wps.append(wp)

    kernel = _make_fused_mlp_kernel(n_layers, compute_dtype)

    # Weights: whole-array VMEM blocks, grid-invariant (same block index on
    # every grid step -> stays resident, no re-DMA across M tiles).
    w_specs = [pl.BlockSpec(wp.shape, lambda i: (0, 0)) for wp in wps]

    # Size the VMEM limit from the actual footprint (double-buffered x/out
    # tiles + resident weights + intermediate activation tiles) with headroom.
    itemsize = jnp.dtype(x.dtype).itemsize
    act_bytes = 2 * tm * (pdims[0] + pdims[-1]) * itemsize          # in/out tiles, x2 buf
    w_bytes = sum(int(wp.size) * jnp.dtype(wp.dtype).itemsize for wp in wps)
    inter_bytes = tm * max(pdims) * 4 * 2                            # f32 intermediates
    vmem_limit = min(128 << 20, max(32 << 20, 2 * (act_bytes + w_bytes + inter_bytes)))
    # TODO(synk): if the summed weights ever exceed VMEM, add a K/N-tiled
    # per-layer fallback; for UNet-latent MLP sizes they comfortably fit.

    flops = 2 * mp * sum(pdims[i] * pdims[i + 1] for i in range(n_layers))
    bytes_accessed = (mp * (pdims[0] + pdims[-1])) * itemsize + w_bytes

    out_padded = pl.pallas_call(
        kernel,
        out_shape=jax.ShapeDtypeStruct((mp, pdims[-1]), x.dtype),
        grid=(grid_m,),
        in_specs=[pl.BlockSpec((tm, pdims[0]), lambda i: (i, 0))] + w_specs,
        out_specs=pl.BlockSpec((tm, pdims[-1]), lambda i: (i, 0)),
        compiler_params=pltpu.CompilerParams(
            dimension_semantics=("parallel",),
            vmem_limit_bytes=int(vmem_limit),
        ),
        cost_estimate=pl.CostEstimate(
            flops=int(flops), transcendentals=0, bytes_accessed=int(bytes_accessed)
        ),
    )(xp, *wps)

    # Slice the padding back off.
    return out_padded[:M, : dims[-1]]


def init_mlp_weights(key, dims, dtype=jnp.float32):
    """Shapes match nn.Linear(dims[i-1], dims[i], bias=False):
    weight shape = (dims[i], dims[i-1])."""
    weights = []
    for i in range(1, len(dims)):
        key, sub = jax.random.split(key)
        fan_in = dims[i - 1]
        bound = 1.0 / float(jnp.sqrt(jnp.float32(fan_in)))
        w = jax.random.uniform(
            sub, (dims[i], dims[i - 1]), dtype=dtype, minval=-bound, maxval=bound
        )
        weights.append(w)
    return weights


def _reference(x, weights):
    ref = x
    for w in weights:
        ref = ref @ w.T
        ref = jnp.where(ref >= 0, ref, NEG_SLOPE * ref)
    return ref


if __name__ == "__main__":
    key = jax.random.PRNGKey(0)

    # Small shapes consistent with the module: x is (batch, dims[0]).
    batch = 8
    dims = (32, 64, 128, 16)

    key, xk = jax.random.split(key)
    x = jax.random.normal(xk, (batch, dims[0]), dtype=jnp.float32)
    weights = init_mlp_weights(key, dims)

    out = jax.block_until_ready(mlp_forward(x, weights))
    ref = _reference(x, weights)
    assert out.shape == (batch, dims[-1])
    assert jnp.allclose(out, ref, atol=1e-5, rtol=1e-5), float(
        jnp.max(jnp.abs(out - ref))
    )

    # Also exercise the M-tiled / multi-grid-step ("parallel") path.
    key, xk2 = jax.random.split(key)
    x_big = jax.random.normal(xk2, (2048, dims[0]), dtype=jnp.float32)
    out_big = jax.block_until_ready(mlp_forward(x_big, weights))
    ref_big = _reference(x_big, weights)
    assert out_big.shape == (2048, dims[-1])
    assert jnp.allclose(out_big, ref_big, atol=1e-5, rtol=1e-5), float(
        jnp.max(jnp.abs(out_big - ref_big))
    )

    print("KERNEL_OK")
</pallas_src>

<mosaic_0001>
module attributes {stable_mosaic.version = 11 : i64} {
  func.func @kernel(%arg0: i32, %arg1: memref<8x128xf32, #tpu.memory_space<vmem>>, %arg2: memref<128x128xf32, #tpu.memory_space<vmem>>, %arg3: memref<128x128xf32, #tpu.memory_space<vmem>>, %arg4: memref<128x128xf32, #tpu.memory_space<vmem>>, %arg5: memref<8x128xf32, #tpu.memory_space<vmem>>) attributes {dimension_semantics = [#tpu.dimension_semantics<parallel>], iteration_bounds = array<i64: 1>, scalar_prefetch = 0 : i64, scratch_operands = 0 : i64, tpu.core_type = #tpu.core_type<tc>, window_params = [{transform_indices = @transform_0, window_bounds = array<i64: 8, 128>}, {pipeline_mode = #tpu.pipeline_mode<synchronous>, transform_indices = @transform_1, window_bounds = array<i64: 128, 128>}, {pipeline_mode = #tpu.pipeline_mode<synchronous>, transform_indices = @transform_2, window_bounds = array<i64: 128, 128>}, {pipeline_mode = #tpu.pipeline_mode<synchronous>, transform_indices = @transform_3, window_bounds = array<i64: 128, 128>}, {transform_indices = @transform_4, window_bounds = array<i64: 8, 128>}]} {
    %c0 = arith.constant 0 : index
    %c0_0 = arith.constant 0 : index
    %0 = vector.load %arg1[%c0, %c0_0] : memref<8x128xf32, #tpu.memory_space<vmem>>, vector<8x128xf32>
    %c0_1 = arith.constant 0 : index
    %c0_2 = arith.constant 0 : index
    %1 = vector.load %arg2[%c0_1, %c0_2] : memref<128x128xf32, #tpu.memory_space<vmem>>, vector<128x128xf32>
    %cst = arith.constant dense<0.000000e+00> : vector<8x128xf32>
    %2 = tpu.matmul %0, %1, %cst {dimension_numbers = #tpu.dot_dimension_numbers<[1], [0], [0], [1], [0, 0, 1, 1], [], []>} : vector<8x128xf32>, vector<128x128xf32>, vector<8x128xf32> -> vector<8x128xf32>
    %cst_3 = arith.constant 0.00999999977 : f32
    %3 = vector.broadcast %cst_3 : f32 to vector<8x128xf32>
    %4 = arith.mulf %3, %2 : vector<8x128xf32>
    %5 = arith.maximumf %2, %4 : vector<8x128xf32>
    %c0_4 = arith.constant 0 : index
    %c0_5 = arith.constant 0 : index
    %6 = vector.load %arg3[%c0_4, %c0_5] : memref<128x128xf32, #tpu.memory_space<vmem>>, vector<128x128xf32>
    %cst_6 = arith.constant dense<0.000000e+00> : vector<8x128xf32>
    %7 = tpu.matmul %5, %6, %cst_6 {dimension_numbers = #tpu.dot_dimension_numbers<[1], [0], [0], [1], [0, 0, 1, 1], [], []>} : vector<8x128xf32>, vector<128x128xf32>, vector<8x128xf32> -> vector<8x128xf32>
    %cst_7 = arith.constant 0.00999999977 : f32
    %8 = vector.broadcast %cst_7 : f32 to vector<8x128xf32>
    %9 = arith.mulf %8, %7 : vector<8x128xf32>
    %10 = arith.maximumf %7, %9 : vector<8x128xf32>
    %c0_8 = arith.constant 0 : index
    %c0_9 = arith.constant 0 : index
    %11 = vector.load %arg4[%c0_8, %c0_9] : memref<128x128xf32, #tpu.memory_space<vmem>>, vector<128x128xf32>
    %cst_10 = arith.constant dense<0.000000e+00> : vector<8x128xf32>
    %12 = tpu.matmul %10, %11, %cst_10 {dimension_numbers = #tpu.dot_dimension_numbers<[1], [0], [0], [1], [0, 0, 1, 1], [], []>} : vector<8x128xf32>, vector<128x128xf32>, vector<8x128xf32> -> vector<8x128xf32>
    %cst_11 = arith.constant 0.00999999977 : f32
    %13 = vector.broadcast %cst_11 : f32 to vector<8x128xf32>
    %14 = arith.mulf %13, %12 : vector<8x128xf32>
    %15 = arith.maximumf %12, %14 : vector<8x128xf32>
    %c0_12 = arith.constant 0 : index
    %c0_13 = arith.constant 0 : index
    %16 = vector.load %arg5[%c0_12, %c0_13] : memref<8x128xf32, #tpu.memory_space<vmem>>, vector<8x128xf32>
    tpu.vector_store %arg5[%c0_12, %c0_13], %15 {strides = array<i32>} : memref<8x128xf32, #tpu.memory_space<vmem>>, vector<8x128xf32>,
    return
  }
  func.func @transform_0(%arg0: i32) -> (i32, i32) {
    %c0_i32 = arith.constant 0 : i32
    %c0_i32_0 = arith.constant 0 : i32
    return %arg0, %c0_i32 : i32, i32
  }
  func.func @transform_1(%arg0: i32) -> (i32, i32) {
    %c0_i32 = arith.constant 0 : i32
    %c0_i32_0 = arith.constant 0 : i32
    %c0_i32_1 = arith.constant 0 : i32
    return %c0_i32, %c0_i32_0 : i32, i32
  }
  func.func @transform_2(%arg0: i32) -> (i32, i32) {
    %c0_i32 = arith.constant 0 : i32
    %c0_i32_0 = arith.constant 0 : i32
    %c0_i32_1 = arith.constant 0 : i32
    return %c0_i32, %c0_i32_0 : i32, i32
  }
  func.func @transform_3(%arg0: i32) -> (i32, i32) {
    %c0_i32 = arith.constant 0 : i32
    %c0_i32_0 = arith.constant 0 : i32
    %c0_i32_1 = arith.constant 0 : i32
    return %c0_i32, %c0_i32_0 : i32, i32
  }
  func.func @transform_4(%arg0: i32) -> (i32, i32) {
    %c0_i32 = arith.constant 0 : i32
    %c0_i32_0 = arith.constant 0 : i32
    return %arg0, %c0_i32 : i32, i32
  }
}

</mosaic_0001>

<llo_original>
// kernel: mlp_forward.1
$region0: #{mlp_forward.1}
  #allocation0 [shape = 'u32[]', space=smem, size = 0x4, offset = 0x4, fixed_abs, tag = 'smem constant byte address 0x4 - core index']
  #allocation1 [shape = 'u32[144,128]{1,0:T(1,128)}', space=vmem, size = 0x12000, scoped, tag = 'internal scratch']
  %s0 = inlined_call_operand.vmem [shape: f32[8,128], index: 0, kind: input, shape index: {}]
  %s1 = inlined_call_operand.vmem [shape: f32[128,128], index: 1, kind: input, shape index: {}]
  %s2 = inlined_call_operand.vmem [shape: f32[128,128], index: 2, kind: input, shape index: {}]
  %s3 = inlined_call_operand.vmem [shape: f32[128,128], index: 3, kind: input, shape index: {}]
  %s4 = inlined_call_operand.hbm [shape: f32[8,128], index: 4, kind: output, shape index: {}]
  %s5 = sld [smem:[#allocation0]]
  $region26: #{mlp_forward.1} parent=0
    _
  %s7 = ssub.s32 1, %s5
  %s8 = scalar_select 0, %s7, %s5
  $region1: #{mlp_forward.1} parent=0
    #allocation2 [shape = 'u8[4096]{0}', space=vmem, size = 0x1000, scoped, tag = 'output window, operand 0, single buffered']
    #allocation3 [shape = 's32[1]{0}', space=sflag, size = 0x4, scoped, tag = 'scoped memory for mlp_forward.1']
    %9 = vsyncpa [#allocation3], 0
    // Predicated region
    $region2: #{mlp_forward.1} parent=1 // pred_check
      _
    $region3: #{mlp_forward.1} parent=1 // pred_check_branch
      %11 = sbr.rel (0) target = $region5
    $region4: #{mlp_forward.1} parent=1 // pred_region
      _
    $region5: #{mlp_forward.1} parent=1 // pred_fallthru
      _
    // Predicated region
    $region6: #{mlp_forward.1} parent=1 // pred_check
      _
    $region7: #{mlp_forward.1} parent=1 // pred_check_branch
      %13 = sbr.rel (0) target = $region9
    $region8: #{mlp_forward.1} parent=1 // pred_region
      _
    $region9: #{mlp_forward.1} parent=1 // pred_fallthru
      _
    // Predicated region
    $region10: #{mlp_forward.1} parent=1 // pred_check
      _
    $region11: #{mlp_forward.1} parent=1 // pred_check_branch
      %15 = sbr.rel (0) target = $region13
    $region12: #{mlp_forward.1} parent=1 // pred_region
      _
    $region13: #{mlp_forward.1} parent=1 // pred_fallthru
      _
    // Predicated region
    $region14: #{mlp_forward.1} parent=1 // pred_check
      _
    $region15: #{mlp_forward.1} parent=1 // pred_check_branch
      %17 = sbr.rel (0) target = $region17
    $region16: #{mlp_forward.1} parent=1 // pred_region
      _
    $region17: #{mlp_forward.1} parent=1 // pred_fallthru
      _
    %v18 = vld [vmem:[%s0] sm:$0xff]
    %v19 = vld [vmem:[%s1] sm:$0xff]
    %v20 = vld [vmem:[%s1 + $0x8] sm:$0xff]
    %v21 = vld [vmem:[%s1 + $0x10] sm:$0xff]
    %v22 = vld [vmem:[%s1 + $0x18] sm:$0xff]
    %v23 = vld [vmem:[%s1 + $0x20] sm:$0xff]
    %v24 = vld [vmem:[%s1 + $0x28] sm:$0xff]
    %v25 = vld [vmem:[%s1 + $0x30] sm:$0xff]
    %v26 = vld [vmem:[%s1 + $0x38] sm:$0xff]
    %v27 = vld [vmem:[%s1 + $0x40] sm:$0xff]
    %v28 = vld [vmem:[%s1 + $0x48] sm:$0xff]
    %v29 = vld [vmem:[%s1 + $0x50] sm:$0xff]
    %v30 = vld [vmem:[%s1 + $0x58] sm:$0xff]
    %v31 = vld [vmem:[%s1 + $0x60] sm:$0xff]
    %v32 = vld [vmem:[%s1 + $0x68] sm:$0xff]
    %v33 = vld [vmem:[%s1 + $0x70] sm:$0xff]
    %v34 = vld [vmem:[%s1 + $0x78] sm:$0xff]
    %35 = vmatprep.subr.mxu0 0.0
    %36 = vmatpush1.msra.mxu0 %v19
    %37 = vmatprep.subr.mxu0 0.0
    %38 = vmatpush1.msra.mxu0 %v20
    %39 = vmatprep.subr.mxu0 0.0
    %40 = vmatpush1.msra.mxu0 %v21
    %41 = vmatprep.subr.mxu0 0.0
    %42 = vmatpush1.msra.mxu0 %v22
    %43 = vmatprep.subr.mxu0 0.0
    %44 = vmatpush1.msra.mxu0 %v23
    %45 = vmatprep.subr.mxu0 0.0
    %46 = vmatpush1.msra.mxu0 %v24
    %47 = vmatprep.subr.mxu0 0.0
    %48 = vmatpush1.msra.mxu0 %v25
    %49 = vmatprep.subr.mxu0 0.0
    %50 = vmatpush1.msra.mxu0 %v26
    %51 = vmatprep.subr.mxu0 0.0
    %52 = vmatpush1.msra.mxu0 %v27
    %53 = vmatprep.subr.mxu0 0.0
    %54 = vmatpush1.msra.mxu0 %v28
    %55 = vmatprep.subr.mxu0 0.0
    %56 = vmatpush1.msra.mxu0 %v29
    %57 = vmatprep.subr.mxu0 0.0
    %58 = vmatpush1.msra.mxu0 %v30
    %59 = vmatprep.subr.mxu0 0.0
    %60 = vmatpush1.msra.mxu0 %v31
    %61 = vmatprep.subr.mxu0 0.0
    %62 = vmatpush1.msra.mxu0 %v32
    %63 = vmatprep.subr.mxu0 0.0
    %64 = vmatpush1.msra.mxu0 %v33
    %65 = vmatprep.subr.mxu0 0.0
    %66 = vmatpush1.msra.mxu0 %v34
    %67 = vmatprep.subr.mxu0 0.0
    %68 = vmatpush1.msra.mxu0 0.0
    %69 = vmatprep.subr.mxu0 0.0
    %70 = vmatpush1.msra.mxu0 0.0
    %71 = vmatprep.subr.mxu0 0.0
    %72 = vmatpush1.msra.mxu0 0.0
    %73 = vmatprep.subr.mxu0 0.0
    %74 = vmatpush1.msra.mxu0 0.0
    %75 = vmatprep.subr.mxu0 0.0
    %76 = vmatpush1.msra.mxu0 0.0
    %77 = vmatprep.subr.mxu0 0.0
    %78 = vmatpush1.msra.mxu0 0.0
    %79 = vmatprep.subr.mxu0 0.0
    %80 = vmatpush1.msra.mxu0 0.0
    %81 = vmatprep.subr.mxu0 0.0
    %82 = vmatpush1.msra.mxu0 0.0
    %83 = vmatprep.subr.mxu0 0.0
    %84 = vmatpush1.msra.mxu0 0.0
    %85 = vmatprep.subr.mxu0 0.0
    %86 = vmatpush1.msra.mxu0 0.0
    %87 = vmatprep.subr.mxu0 0.0
    %88 = vmatpush1.msra.mxu0 0.0
    %89 = vmatprep.subr.mxu0 0.0
    %90 = vmatpush1.msra.mxu0 0.0
    %91 = vmatprep.subr.mxu0 0.0
    %92 = vmatpush1.msra.mxu0 0.0
    %93 = vmatprep.subr.mxu0 0.0
    %94 = vmatpush1.msra.mxu0 0.0
    %95 = vmatprep.subr.mxu0 0.0
    %96 = vmatpush1.msra.mxu0 0.0
    %97 = vmatprep.subr.mxu0 0.0
    %98 = vmatpush1.msra.mxu0 0.0
    %99 = vmatprep.mubr.f32.mxu0 0.0
    %100 = vmatmul.mubr.f32.gmra.mrb[0].mxu0 %v18
    %v101 = vpop.f32.mrb[0].mxu0
    %v102 = vadd.f32 0.0, %v101
    %v103 = vpop.f32.mrb[0].mxu0
    %104 = vdwg.mxu0
    %v105 = vmul.f32 %v102, 0.01
    %v106 = vmax.f32 %v102, %v105
    %v107 = vld [vmem:[%s2] sm:$0xff]
    %v108 = vld [vmem:[%s2 + $0x8] sm:$0xff]
    %v109 = vld [vmem:[%s2 + $0x10] sm:$0xff]
    %v110 = vld [vmem:[%s2 + $0x18] sm:$0xff]
    %v111 = vld [vmem:[%s2 + $0x20] sm:$0xff]
    %v112 = vld [vmem:[%s2 + $0x28] sm:$0xff]
    %v113 = vld [vmem:[%s2 + $0x30] sm:$0xff]
    %v114 = vld [vmem:[%s2 + $0x38] sm:$0xff]
    %v115 = vld [vmem:[%s2 + $0x40] sm:$0xff]
    %v116 = vld [vmem:[%s2 + $0x48] sm:$0xff]
    %v117 = vld [vmem:[%s2 + $0x50] sm:$0xff]
    %v118 = vld [vmem:[%s2 + $0x58] sm:$0xff]
    %v119 = vld [vmem:[%s2 + $0x60] sm:$0xff]
    %v120 = vld [vmem:[%s2 + $0x68] sm:$0xff]
    %v121 = vld [vmem:[%s2 + $0x70] sm:$0xff]
    %v122 = vld [vmem:[%s2 + $0x78] sm:$0xff]
    %123 = vmatprep.subr.mxu0 0.0
    %124 = vmatpush1.msra.mxu0 %v107
    %125 = vmatprep.subr.mxu0 0.0
    %126 = vmatpush1.msra.mxu0 %v108
    %127 = vmatprep.subr.mxu0 0.0
    %128 = vmatpush1.msra.mxu0 %v109
    %129 = vmatprep.subr.mxu0 0.0
    %130 = vmatpush1.msra.mxu0 %v110
    %131 = vmatprep.subr.mxu0 0.0
    %132 = vmatpush1.msra.mxu0 %v111
    %133 = vmatprep.subr.mxu0 0.0
    %134 = vmatpush1.msra.mxu0 %v112
    %135 = vmatprep.subr.mxu0 0.0
    %136 = vmatpush1.msra.mxu0 %v113
    %137 = vmatprep.subr.mxu0 0.0
    %138 = vmatpush1.msra.mxu0 %v114
    %139 = vmatprep.subr.mxu0 0.0
    %140 = vmatpush1.msra.mxu0 %v115
    %141 = vmatprep.subr.mxu0 0.0
    %142 = vmatpush1.msra.mxu0 %v116
    %143 = vmatprep.subr.mxu0 0.0
    %144 = vmatpush1.msra.mxu0 %v117
    %145 = vmatprep.subr.mxu0 0.0
    %146 = vmatpush1.msra.mxu0 %v118
    %147 = vmatprep.subr.mxu0 0.0
    %148 = vmatpush1.msra.mxu0 %v119
    %149 = vmatprep.subr.mxu0 0.0
    %150 = vmatpush1.msra.mxu0 %v120
    %151 = vmatprep.subr.mxu0 0.0
    %152 = vmatpush1.msra.mxu0 %v121
    %153 = vmatprep.subr.mxu0 0.0
    %154 = vmatpush1.msra.mxu0 %v122
    %155 = vmatprep.subr.mxu0 0.0
    %156 = vmatpush1.msra.mxu0 0.0
    %157 = vmatprep.subr.mxu0 0.0
    %158 = vmatpush1.msra.mxu0 0.0
    %159 = vmatprep.subr.mxu0 0.0
    %160 = vmatpush1.msra.mxu0 0.0
    %161 = vmatprep.subr.mxu0 0.0
    %162 = vmatpush1.msra.mxu0 0.0
    %163 = vmatprep.subr.mxu0 0.0
    %164 = vmatpush1.msra.mxu0 0.0
    %165 = vmatprep.subr.mxu0 0.0
    %166 = vmatpush1.msra.mxu0 0.0
    %167 = vmatprep.subr.mxu0 0.0
    %168 = vmatpush1.msra.mxu0 0.0
    %169 = vmatprep.subr.mxu0 0.0
    %170 = vmatpush1.msra.mxu0 0.0
    %171 = vmatprep.subr.mxu0 0.0
    %172 = vmatpush1.msra.mxu0 0.0
    %173 = vmatprep.subr.mxu0 0.0
    %174 = vmatpush1.msra.mxu0 0.0
    %175 = vmatprep.subr.mxu0 0.0
    %176 = vmatpush1.msra.mxu0 0.0
    %177 = vmatprep.subr.mxu0 0.0
    %178 = vmatpush1.msra.mxu0 0.0
    %179 = vmatprep.subr.mxu0 0.0
    %180 = vmatpush1.msra.mxu0 0.0
    %181 = vmatprep.subr.mxu0 0.0
    %182 = vmatpush1.msra.mxu0 0.0
    %183 = vmatprep.subr.mxu0 0.0
    %184 = vmatpush1.msra.mxu0 0.0
    %185 = vmatprep.subr.mxu0 0.0
    %186 = vmatpush1.msra.mxu0 0.0
    %187 = vmatprep.mubr.f32.mxu0 0.0
    %188 = vmatmul.mubr.f32.gmra.mrb[0].mxu0 %v106
    %v189 = vpop.f32.mrb[0].mxu0
    %v190 = vadd.f32 0.0, %v189
    %v191 = vpop.f32.mrb[0].mxu0
    %192 = vdwg.mxu0
    %v193 = vmul.f32 %v190, 0.01
    %v194 = vmax.f32 %v190, %v193
    %v195 = vld [vmem:[%s3] sm:$0xff]
    %v196 = vld [vmem:[%s3 + $0x8] sm:$0xff]
    %v197 = vld [vmem:[%s3 + $0x10] sm:$0xff]
    %v198 = vld [vmem:[%s3 + $0x18] sm:$0xff]
    %v199 = vld [vmem:[%s3 + $0x20] sm:$0xff]
    %v200 = vld [vmem:[%s3 + $0x28] sm:$0xff]
    %v201 = vld [vmem:[%s3 + $0x30] sm:$0xff]
    %v202 = vld [vmem:[%s3 + $0x38] sm:$0xff]
    %v203 = vld [vmem:[%s3 + $0x40] sm:$0xff]
    %v204 = vld [vmem:[%s3 + $0x48] sm:$0xff]
    %v205 = vld [vmem:[%s3 + $0x50] sm:$0xff]
    %v206 = vld [vmem:[%s3 + $0x58] sm:$0xff]
    %v207 = vld [vmem:[%s3 + $0x60] sm:$0xff]
    %v208 = vld [vmem:[%s3 + $0x68] sm:$0xff]
    %v209 = vld [vmem:[%s3 + $0x70] sm:$0xff]
    %v210 = vld [vmem:[%s3 + $0x78] sm:$0xff]
    %211 = vmatprep.subr.mxu0 0.0
    %212 = vmatpush1.msra.mxu0 %v195
    %213 = vmatprep.subr.mxu0 0.0
    %214 = vmatpush1.msra.mxu0 %v196
    %215 = vmatprep.subr.mxu0 0.0
    %216 = vmatpush1.msra.mxu0 %v197
    %217 = vmatprep.subr.mxu0 0.0
    %218 = vmatpush1.msra.mxu0 %v198
    %219 = vmatprep.subr.mxu0 0.0
    %220 = vmatpush1.msra.mxu0 %v199
    %221 = vmatprep.subr.mxu0 0.0
    %222 = vmatpush1.msra.mxu0 %v200
    %223 = vmatprep.subr.mxu0 0.0
    %224 = vmatpush1.msra.mxu0 %v201
    %225 = vmatprep.subr.mxu0 0.0
    %226 = vmatpush1.msra.mxu0 %v202
    %227 = vmatprep.subr.mxu0 0.0
    %228 = vmatpush1.msra.mxu0 %v203
    %229 = vmatprep.subr.mxu0 0.0
    %230 = vmatpush1.msra.mxu0 %v204
    %231 = vmatprep.subr.mxu0 0.0
    %232 = vmatpush1.msra.mxu0 %v205
    %233 = vmatprep.subr.mxu0 0.0
    %234 = vmatpush1.msra.mxu0 %v206
    %235 = vmatprep.subr.mxu0 0.0
    %236 = vmatpush1.msra.mxu0 %v207
    %237 = vmatprep.subr.mxu0 0.0
    %238 = vmatpush1.msra.mxu0 %v208
    %239 = vmatprep.subr.mxu0 0.0
    %240 = vmatpush1.msra.mxu0 %v209
    %241 = vmatprep.subr.mxu0 0.0
    %242 = vmatpush1.msra.mxu0 %v210
    %243 = vmatprep.subr.mxu0 0.0
    %244 = vmatpush1.msra.mxu0 0.0
    %245 = vmatprep.subr.mxu0 0.0
    %246 = vmatpush1.msra.mxu0 0.0
    %247 = vmatprep.subr.mxu0 0.0
    %248 = vmatpush1.msra.mxu0 0.0
    %249 = vmatprep.subr.mxu0 0.0
    %250 = vmatpush1.msra.mxu0 0.0
    %251 = vmatprep.subr.mxu0 0.0
    %252 = vmatpush1.msra.mxu0 0.0
    %253 = vmatprep.subr.mxu0 0.0
    %254 = vmatpush1.msra.mxu0 0.0
    %255 = vmatprep.subr.mxu0 0.0
    %256 = vmatpush1.msra.mxu0 0.0
    %257 = vmatprep.subr.mxu0 0.0
    %258 = vmatpush1.msra.mxu0 0.0
    %259 = vmatprep.subr.mxu0 0.0
    %260 = vmatpush1.msra.mxu0 0.0
    %261 = vmatprep.subr.mxu0 0.0
    %262 = vmatpush1.msra.mxu0 0.0
    %263 = vmatprep.subr.mxu0 0.0
    %264 = vmatpush1.msra.mxu0 0.0
    %265 = vmatprep.subr.mxu0 0.0
    %266 = vmatpush1.msra.mxu0 0.0
    %267 = vmatprep.subr.mxu0 0.0
    %268 = vmatpush1.msra.mxu0 0.0
    %269 = vmatprep.subr.mxu0 0.0
    %270 = vmatpush1.msra.mxu0 0.0
    %271 = vmatprep.subr.mxu0 0.0
    %272 = vmatpush1.msra.mxu0 0.0
    %273 = vmatprep.subr.mxu0 0.0
    %274 = vmatpush1.msra.mxu0 0.0
    %275 = vmatprep.mubr.f32.mxu0 0.0
    %276 = vmatmul.mubr.f32.gmra.mrb[0].mxu0 %v194
    %v277 = vpop.f32.mrb[0].mxu0
    %v278 = vadd.f32 0.0, %v277
    %v279 = vpop.f32.mrb[0].mxu0
    %280 = vdwg.mxu0
    %v281 = vmul.f32 %v278, 0.01
    %v282 = vmax.f32 %v278, %v281
    %283 = vst [vmem:[#allocation2] sm:$0xff] %v282
    // Predicated region
    $region18: #{mlp_forward.1} parent=1 // pred_check
      _
    $region19: #{mlp_forward.1} parent=1 // pred_check_branch
      %285 = sbr.rel (0) target = $region21
    $region20: #{mlp_forward.1} parent=1 // pred_region
      %s287 = ssub.s32 128, 128
      %288 = vsyncadd [#allocation3], %s287
      %s290 = sshll.u32 [#allocation2], 4
      %s291 = int_to_ptr.vmem [resolvable:$true] %s290
      %293 = dma.vmem_to_hbm [thread:$0]  %s291, 128, %s4, [#allocation3]
    $region21: #{mlp_forward.1} parent=1 // pred_fallthru
      _
    // Predicated region
    $region22: #{mlp_forward.1} parent=1 // pred_check
      _
    $region23: #{mlp_forward.1} parent=1 // pred_check_branch
      %295 = sbr.rel (0) target = $region25
    $region24: #{mlp_forward.1} parent=1 // pred_region
      %296 = dma.done [#allocation3], 128
    $region25: #{mlp_forward.1} parent=1 // pred_fallthru
      _
    %297 = vsyncpa [#allocation3], 1

</llo_original>
